<compile_context>
chip_gen: v5e
topology: v5e:2x2
jax: 0.10.0
libtpu: 0.0.40
codegen_flags: <defaults>
</compile_context>

<pallas_src>
import math

import jax
import jax.numpy as jnp
from jax.experimental import pallas as pl
from jax.experimental.pallas import tpu as pltpu


def _round_up(n, m):
    return ((n + m - 1) // m) * m


def mlp_kernel(x_ref, w1_ref, b1_ref, w2_ref, b2_ref, o_ref, h_ref):
    # hidden = relu(x @ W1^T + b1); MXU accumulates in f32, bias/ReLU in f32.
    x = x_ref[...]
    if x.dtype != w1_ref.dtype:          # trace-time check; cast for bf16 MXU path
        x = x.astype(w1_ref.dtype)
    h = jnp.dot(x, w1_ref[...], preferred_element_type=jnp.float32)
    h_ref[...] = jnp.maximum(h + b1_ref[...], 0.0)            # (tm, Hp) f32
    # out = hidden @ W2^T + b2
    o = jnp.dot(h_ref[...].astype(w2_ref.dtype), w2_ref[...],
                preferred_element_type=jnp.float32)
    o_ref[...] = (o + b2_ref[...]).astype(o_ref.dtype)         # (tm, Op)


def prepare_mlp_params(w1, b1, w2, b2, *, matmul_dtype=None):
    """One-time weight prep (PyTorch (out,in) layout -> transposed, lane-dense).

    Keeps K = num_features un-padded so x needs no wrapper-side copy; pads only
    the hidden/output feature dims to multiples of 128 (zeros -> math exact).
    """
    H, F = w1.shape
    O, H2 = w2.shape
    assert H == H2
    Hp = _round_up(H, 128)     # 64  -> 128
    Op = _round_up(O, 128)     # 10  -> 128
    wdt = jnp.float32 if matmul_dtype is None else matmul_dtype

    w1t = jnp.zeros((F, Hp), wdt).at[:, :H].set(w1.T.astype(wdt))
    w2t = jnp.zeros((Hp, Op), wdt).at[:H, :O].set(w2.T.astype(wdt))
    b1p = jnp.zeros((1, Hp), jnp.float32).at[0, :H].set(b1.astype(jnp.float32))
    b2p = jnp.zeros((1, Op), jnp.float32).at[0, :O].set(b2.astype(jnp.float32))
    return dict(w1t=w1t, b1p=b1p, w2t=w2t, b2p=b2p, F=F, H=H, O=O)


def mlp_forward_prepared(x, params, *, tm=512):
    """Forward with pre-prepared params.  x: (B, F) float32.  Returns (B, O)."""
    B, F = x.shape
    assert F == params["F"]
    w1t, b1p, w2t, b2p = params["w1t"], params["b1p"], params["w2t"], params["b2p"]
    Hp, Op, O = w1t.shape[1], w2t.shape[1], params["O"]

    # Batch tile: clamp for tiny batches; for large batches keep >= 2 grid
    # steps so the "parallel" batch axis can shard across v7x's two TCs.
    Bp8 = _round_up(B, 8)
    tm_eff = min(tm, Bp8)
    if pl.cdiv(Bp8, tm_eff) < 2 and Bp8 >= 512:
        tm_eff = _round_up(pl.cdiv(Bp8, 2), 8)
    grid = (pl.cdiv(B, tm_eff),)

    # VMEM estimate: double-buffered x / out tiles + resident weights + scratch.
    xb = jnp.dtype(x.dtype).itemsize
    wb = jnp.dtype(w1t.dtype).itemsize
    vmem_bytes = (2 * tm_eff * F * xb + 2 * tm_eff * Op * 4
                  + (F * Hp + Hp * Op) * wb + (Hp + Op) * 4
                  + tm_eff * Hp * 4)
    cp_kwargs = dict(dimension_semantics=("parallel",))  # batch tiles -> megacore
    if vmem_bytes > 12 * 1024 * 1024:   # only needed on v5e-sized scoped VMEM
        cp_kwargs["vmem_limit_bytes"] = min(int(vmem_bytes * 1.5), 100 << 20)

    out_padded = pl.pallas_call(
        mlp_kernel,
        out_shape=jax.ShapeDtypeStruct((B, Op), x.dtype),
        grid_spec=pltpu.PrefetchScalarGridSpec(
            num_scalar_prefetch=0,
            grid=grid,
            in_specs=[
                # x streamed, no padding/copy: last dim 784 == full array dim.
                # (Optionally sweep pipeline_mode=pl.Buffered(3) here.)
                pl.BlockSpec((tm_eff, F), lambda i: (i, 0)),
                pl.BlockSpec((F, Hp), lambda i: (0, 0)),    # W1^T (resident)
                pl.BlockSpec((1, Hp), lambda i: (0, 0)),    # b1
                pl.BlockSpec((Hp, Op), lambda i: (0, 0)),   # W2^T (resident)
                pl.BlockSpec((1, Op), lambda i: (0, 0)),    # b2
            ],
            out_specs=pl.BlockSpec((tm_eff, Op), lambda i: (i, 0)),  # lane-dense
            scratch_shapes=[pltpu.VMEM((tm_eff, Hp), jnp.float32)],  # hidden stage
        ),
        compiler_params=pltpu.CompilerParams(**cp_kwargs),
    )(x, w1t, b1p, w2t, b2p)

    # Strip the padded output columns (rows beyond B never exist in the output).
    return out_padded[:, :O]


def mlp_forward(x, w1, b1, w2, b2, *, tm=512, matmul_dtype=None):
    """Convenience wrapper matching the PyTorch module's forward (one-shot use).

    For a training/inference loop, call prepare_mlp_params once and reuse it.
    """
    params = prepare_mlp_params(w1, b1, w2, b2, matmul_dtype=matmul_dtype)
    return mlp_forward_prepared(x, params, tm=tm)


def xavier_normal(key, shape):
    # PyTorch init.xavier_normal_ for a (fan_out, fan_in) weight, gain = 1.
    fan_out, fan_in = shape
    std = math.sqrt(2.0 / (fan_in + fan_out))
    return std * jax.random.normal(key, shape, dtype=jnp.float32)


def reference_mlp(x, w1, b1, w2, b2):
    # Pure-JAX reference matching the PyTorch forward (weights in PyTorch layout).
    h = jnp.maximum(x @ w1.T + b1, 0.0)
    return h @ w2.T + b2


if __name__ == "__main__":
    num_features = 784
    num_hidden = 64
    num_outputs = 10

    key = jax.random.PRNGKey(0)
    kx, kx2, k1, k2 = jax.random.split(key, 4)

    # Parameters, deterministic init (PyTorch layout: (out, in)).
    W_1 = xavier_normal(k1, (num_hidden, num_features))
    b_1 = jnp.zeros((num_hidden,), dtype=jnp.float32)
    W_2 = xavier_normal(k2, (num_outputs, num_hidden))
    b_2 = jnp.zeros((num_outputs,), dtype=jnp.float32)

    # Prepare (transpose + pad) the weights ONCE; reuse across calls.
    params_f32 = prepare_mlp_params(W_1, b_1, W_2, b_2)

    # Small ragged batch (not a multiple of 8): exercises the partial-block
    # path, single-step grid, no wrapper-side copies of x.
    batch = 30
    x = jax.random.normal(kx, (batch, num_features), dtype=jnp.float32)
    out = jax.block_until_ready(mlp_forward_prepared(x, params_f32))
    ref = reference_mlp(x, W_1, b_1, W_2, b_2)
    assert out.shape == (batch, num_outputs)
    assert jnp.allclose(out, ref, atol=1e-4, rtol=1e-4)

    # Larger batch: tm heuristic splits into >=2 grid steps (megacore on v7x).
    batch2 = 512
    x2 = jax.random.normal(kx2, (batch2, num_features), dtype=jnp.float32)
    out2 = jax.block_until_ready(mlp_forward_prepared(x2, params_f32))
    ref2 = reference_mlp(x2, W_1, b_1, W_2, b_2)
    assert out2.shape == (batch2, num_outputs)
    assert jnp.allclose(out2, ref2, atol=1e-4, rtol=1e-4)

    # Optional bf16-MXU path (weights prepared in bf16 once; x cast in-kernel).
    params_bf16 = prepare_mlp_params(W_1, b_1, W_2, b_2, matmul_dtype=jnp.bfloat16)
    out3 = jax.block_until_ready(mlp_forward_prepared(x2, params_bf16))
    assert out3.shape == (batch2, num_outputs)
    assert jnp.allclose(out3, ref2, atol=0.25, rtol=0.1)  # bf16 precision, not a bug

    print("KERNEL_OK")
</pallas_src>

<mosaic_0001>
module attributes {stable_mosaic.version = 11 : i64} {
  func.func @mlp_kernel(%arg0: i32, %arg1: memref<32x784xf32, #tpu.memory_space<vmem>>, %arg2: memref<784x128xf32, #tpu.memory_space<vmem>>, %arg3: memref<1x128xf32, #tpu.memory_space<vmem>>, %arg4: memref<128x128xf32, #tpu.memory_space<vmem>>, %arg5: memref<1x128xf32, #tpu.memory_space<vmem>>, %arg6: memref<32x128xf32, #tpu.memory_space<vmem>>, %arg7: memref<32x128xf32, #tpu.memory_space<vmem>>) attributes {dimension_semantics = [#tpu.dimension_semantics<parallel>], iteration_bounds = array<i64: 1>, scalar_prefetch = 0 : i64, scratch_operands = 1 : i64, tpu.core_type = #tpu.core_type<tc>, window_params = [{transform_indices = @transform_0, window_bounds = array<i64: 32, 784>}, {pipeline_mode = #tpu.pipeline_mode<synchronous>, transform_indices = @transform_1, window_bounds = array<i64: 784, 128>}, {pipeline_mode = #tpu.pipeline_mode<synchronous>, transform_indices = @transform_2, window_bounds = array<i64: 1, 128>}, {pipeline_mode = #tpu.pipeline_mode<synchronous>, transform_indices = @transform_3, window_bounds = array<i64: 128, 128>}, {pipeline_mode = #tpu.pipeline_mode<synchronous>, transform_indices = @transform_4, window_bounds = array<i64: 1, 128>}, {transform_indices = @transform_5, window_bounds = array<i64: 32, 128>}]} {
    %c0 = arith.constant 0 : index
    %c0_0 = arith.constant 0 : index
    %0 = vector.load %arg1[%c0, %c0_0] : memref<32x784xf32, #tpu.memory_space<vmem>>, vector<32x784xf32>
    %c0_1 = arith.constant 0 : index
    %c0_2 = arith.constant 0 : index
    %1 = vector.load %arg2[%c0_1, %c0_2] : memref<784x128xf32, #tpu.memory_space<vmem>>, vector<784x128xf32>
    %cst = arith.constant dense<0.000000e+00> : vector<32x128xf32>
    %2 = tpu.matmul %0, %1, %cst {dimension_numbers = #tpu.dot_dimension_numbers<[1], [0], [0], [1], [0, 0, 1, 1], [], []>} : vector<32x784xf32>, vector<784x128xf32>, vector<32x128xf32> -> vector<32x128xf32>
    %c0_3 = arith.constant 0 : index
    %c0_4 = arith.constant 0 : index
    %3 = vector.load %arg3[%c0_3, %c0_4] : memref<1x128xf32, #tpu.memory_space<vmem>>, vector<1x128xf32>
    %4 = vector.broadcast %3 : vector<1x128xf32> to vector<32x128xf32>
    %5 = arith.addf %2, %4 : vector<32x128xf32>
    %cst_5 = arith.constant 0.000000e+00 : f32
    %6 = vector.broadcast %cst_5 : f32 to vector<32x128xf32>
    %7 = arith.maximumf %5, %6 : vector<32x128xf32>
    %c0_6 = arith.constant 0 : index
    %c0_7 = arith.constant 0 : index
    %8 = vector.load %arg7[%c0_6, %c0_7] : memref<32x128xf32, #tpu.memory_space<vmem>>, vector<32x128xf32>
    tpu.vector_store %arg7[%c0_6, %c0_7], %7 {strides = array<i32>} : memref<32x128xf32, #tpu.memory_space<vmem>>, vector<32x128xf32>,
    %c0_8 = arith.constant 0 : index
    %c0_9 = arith.constant 0 : index
    %9 = vector.load %arg7[%c0_8, %c0_9] : memref<32x128xf32, #tpu.memory_space<vmem>>, vector<32x128xf32>
    %c0_10 = arith.constant 0 : index
    %c0_11 = arith.constant 0 : index
    %10 = vector.load %arg4[%c0_10, %c0_11] : memref<128x128xf32, #tpu.memory_space<vmem>>, vector<128x128xf32>
    %cst_12 = arith.constant dense<0.000000e+00> : vector<32x128xf32>
    %11 = tpu.matmul %9, %10, %cst_12 {dimension_numbers = #tpu.dot_dimension_numbers<[1], [0], [0], [1], [0, 0, 1, 1], [], []>} : vector<32x128xf32>, vector<128x128xf32>, vector<32x128xf32> -> vector<32x128xf32>
    %c0_13 = arith.constant 0 : index
    %c0_14 = arith.constant 0 : index
    %12 = vector.load %arg5[%c0_13, %c0_14] : memref<1x128xf32, #tpu.memory_space<vmem>>, vector<1x128xf32>
    %13 = vector.broadcast %12 : vector<1x128xf32> to vector<32x128xf32>
    %14 = arith.addf %11, %13 : vector<32x128xf32>
    %c0_15 = arith.constant 0 : index
    %c0_16 = arith.constant 0 : index
    %15 = vector.load %arg6[%c0_15, %c0_16] : memref<32x128xf32, #tpu.memory_space<vmem>>, vector<32x128xf32>
    tpu.vector_store %arg6[%c0_15, %c0_16], %14 {strides = array<i32>} : memref<32x128xf32, #tpu.memory_space<vmem>>, vector<32x128xf32>,
    return
  }
  func.func @transform_0(%arg0: i32) -> (i32, i32) {
    %c0_i32 = arith.constant 0 : i32
    %c0_i32_0 = arith.constant 0 : i32
    return %arg0, %c0_i32 : i32, i32
  }
  func.func @transform_1(%arg0: i32) -> (i32, i32) {
    %c0_i32 = arith.constant 0 : i32
    %c0_i32_0 = arith.constant 0 : i32
    %c0_i32_1 = arith.constant 0 : i32
    return %c0_i32, %c0_i32_0 : i32, i32
  }
  func.func @transform_2(%arg0: i32) -> (i32, i32) {
    %c0_i32 = arith.constant 0 : i32
    %c0_i32_0 = arith.constant 0 : i32
    %c0_i32_1 = arith.constant 0 : i32
    return %c0_i32, %c0_i32_0 : i32, i32
  }
  func.func @transform_3(%arg0: i32) -> (i32, i32) {
    %c0_i32 = arith.constant 0 : i32
    %c0_i32_0 = arith.constant 0 : i32
    %c0_i32_1 = arith.constant 0 : i32
    return %c0_i32, %c0_i32_0 : i32, i32
  }
  func.func @transform_4(%arg0: i32) -> (i32, i32) {
    %c0_i32 = arith.constant 0 : i32
    %c0_i32_0 = arith.constant 0 : i32
    %c0_i32_1 = arith.constant 0 : i32
    return %c0_i32, %c0_i32_0 : i32, i32
  }
  func.func @transform_5(%arg0: i32) -> (i32, i32) {
    %c0_i32 = arith.constant 0 : i32
    %c0_i32_0 = arith.constant 0 : i32
    return %arg0, %c0_i32 : i32, i32
  }
}

</mosaic_0001>

<llo_original>
// kernel: tpu_custom_call.1
$region0: #{tpu_custom_call.1}
  #allocation0 [shape = 'u32[]', space=smem, size = 0x4, offset = 0x4, fixed_abs, tag = 'smem constant byte address 0x4 - core index']
  #allocation1 [shape = 'u32[72,128]{1,0:T(1,128)}', space=vmem, size = 0x9000, scoped, tag = 'internal scratch']
  #allocation2 [shape = 'f32[32,128]{1,0:T(8,128)}', space=vmem, size = 0x4000, scoped, tag = 'scratch operand']
  %s0 = inlined_call_operand.hbm [shape: f32[30,784], index: 0, kind: input, shape index: {}]
  %s1 = inlined_call_operand.hbm [shape: f32[784,128], index: 1, kind: input, shape index: {}]
  %s2 = inlined_call_operand.vmem [shape: f32[1,128], index: 2, kind: input, shape index: {}]
  %s3 = inlined_call_operand.hbm [shape: f32[128,128], index: 3, kind: input, shape index: {}]
  %s4 = inlined_call_operand.vmem [shape: f32[1,128], index: 4, kind: input, shape index: {}]
  %s5 = inlined_call_operand.hbm [shape: f32[30,128], index: 5, kind: output, shape index: {}]
  %s6 = sld [smem:[#allocation0]]
  $region42: #{tpu_custom_call.1} parent=0
    _
  %s8 = ssub.s32 1, %s6
  %s9 = scalar_select 0, %s8, %s6
  $region1: #{tpu_custom_call.1} parent=0
    #allocation3 [shape = 'u8[114688]{0}', space=vmem, size = 0x1c000, scoped, tag = 'input window, operand 0, single buffered']
    #allocation4 [shape = 's32[1]{0}', space=sflag, size = 0x4, scoped, tag = 'scoped memory for tpu_custom_call.1']
    #allocation5 [shape = 's32[1]{0}', space=sflag, size = 0x4, scoped, tag = 'scoped memory for tpu_custom_call.1']
    #allocation6 [shape = 'u8[401408]{0}', space=vmem, size = 0x62000, scoped, tag = 'input window, operand 1, single buffered']
    #allocation7 [shape = 's32[1]{0}', space=sflag, size = 0x4, scoped, tag = 'scoped memory for tpu_custom_call.1']
    #allocation8 [shape = 'u8[65536]{0}', space=vmem, size = 0x10000, scoped, tag = 'input window, operand 3, single buffered']
    #allocation9 [shape = 'u8[16384]{0}', space=vmem, size = 0x4000, scoped, tag = 'output window, operand 0, single buffered']
    %10 = vsyncpa [#allocation4], 0
    %11 = vsyncpa [#allocation7], 0
    %12 = vsyncpa [#allocation5], 0
    // Predicated region
    $region2: #{tpu_custom_call.1} parent=1 // pred_check
      _
    $region3: #{tpu_custom_call.1} parent=1 // pred_check_branch
      %14 = sbr.rel (0) target = $region5
    $region4: #{tpu_custom_call.1} parent=1 // pred_region
      %16 = vsyncadd [#allocation4], 0
      %s17 = sshll.u32 %s0, 4
      %s18 = int_to_ptr.hbm [resolvable:$true] %s17
      %s19 = sshll.u32 [#allocation3], 4
      %s20 = int_to_ptr.vmem [resolvable:$true] %s19
      %25 = dma.hbm_to_vmem [thread:$0]  %s18, 3584, %s20, [#allocation4], 896, 896, 56
    $region5: #{tpu_custom_call.1} parent=1 // pred_fallthru
      _
    // Predicated region
    $region6: #{tpu_custom_call.1} parent=1 // pred_check
      _
    $region7: #{tpu_custom_call.1} parent=1 // pred_check_branch
      %27 = sbr.rel (0) target = $region9
    $region8: #{tpu_custom_call.1} parent=1 // pred_region
      %29 = vsyncadd [#allocation7], 0
      %s30 = sshll.u32 %s1, 4
      %s31 = int_to_ptr.hbm [resolvable:$true] %s30
      %s32 = sshll.u32 [#allocation6], 4
      %s33 = int_to_ptr.vmem [resolvable:$true] %s32
      %38 = dma.hbm_to_vmem [thread:$0]  %s31, 12544, %s33, [#allocation7], 128, 128, 8
    $region9: #{tpu_custom_call.1} parent=1 // pred_fallthru
      _
    // Predicated region
    $region10: #{tpu_custom_call.1} parent=1 // pred_check
      _
    $region11: #{tpu_custom_call.1} parent=1 // pred_check_branch
      %40 = sbr.rel (0) target = $region13
    $region12: #{tpu_custom_call.1} parent=1 // pred_region
      _
    $region13: #{tpu_custom_call.1} parent=1 // pred_fallthru
      _
    // Predicated region
    $region14: #{tpu_custom_call.1} parent=1 // pred_check
      _
    $region15: #{tpu_custom_call.1} parent=1 // pred_check_branch
      %42 = sbr.rel (0) target = $region17
    $region16: #{tpu_custom_call.1} parent=1 // pred_region
      %44 = vsyncadd [#allocation7], 0
      %s45 = sshll.u32 %s3, 4
      %s46 = int_to_ptr.hbm [resolvable:$true] %s45
      %s47 = sshll.u32 [#allocation8], 4
      %s48 = int_to_ptr.vmem [resolvable:$true] %s47
      %53 = dma.hbm_to_vmem [thread:$0]  %s46, 2048, %s48, [#allocation7], 128, 128, 8
    $region17: #{tpu_custom_call.1} parent=1 // pred_fallthru
      _
    // Predicated region
    $region18: #{tpu_custom_call.1} parent=1 // pred_check
      _
    $region19: #{tpu_custom_call.1} parent=1 // pred_check_branch
      %55 = sbr.rel (0) target = $region21
    $region20: #{tpu_custom_call.1} parent=1 // pred_region
      _
    $region21: #{tpu_custom_call.1} parent=1 // pred_fallthru
      _
    // Predicated region
    $region22: #{tpu_custom_call.1} parent=1 // pred_check
      _
    $region23: #{tpu_custom_call.1} parent=1 // pred_check_branch
      %57 = sbr.rel (0) target = $region25
    $region24: #{tpu_custom_call.1} parent=1 // pred_region
      %59 = dma.done [#allocation4], 3584
    $region25: #{tpu_custom_call.1} parent=1 // pred_fallthru
      _
    // Predicated region
    $region26: #{tpu_custom_call.1} parent=1 // pred_check
      _
    $region27: #{tpu_custom_call.1} parent=1 // pred_check_branch
      %61 = sbr.rel (0) target = $region29
    $region28: #{tpu_custom_call.1} parent=1 // pred_region
      %63 = dma.done [#allocation7], 12544
    $region29: #{tpu_custom_call.1} parent=1 // pred_fallthru
      _
    // Predicated region
    $region30: #{tpu_custom_call.1} parent=1 // pred_check
      _
    $region31: #{tpu_custom_call.1} parent=1 // pred_check_branch
      %65 = sbr.rel (0) target = $region33
    $region32: #{tpu_custom_call.1} parent=1 // pred_region
      %67 = dma.done [#allocation7], 2048
    $region33: #{tpu_custom_call.1} parent=1 // pred_fallthru
      _
    %v68 = vld [vmem:[#allocation3] sm:$0xff]
    %v69 = vld [vmem:[#allocation3 + $0x8] sm:$0xff]
    %v70 = vld [vmem:[#allocation3 + $0x10] sm:$0xff]
    %v71 = vld [vmem:[#allocation3 + $0x18] sm:$0xff]
    %v72 = vld [vmem:[#allocation3 + $0x20] sm:$0xff]
    %v73 = vld [vmem:[#allocation3 + $0x28] sm:$0xff]
    %v74 = vld [vmem:[#allocation3 + $0x30] sm:$0xff]
    %v75 = vld [vmem:[#allocation3 + $0x38] sm:$0xff]
    %v76 = vld [vmem:[#allocation3 + $0x40] sm:$0xff]
    %v77 = vld [vmem:[#allocation3 + $0x48] sm:$0xff]
    %v78 = vld [vmem:[#allocation3 + $0x50] sm:$0xff]
    %v79 = vld [vmem:[#allocation3 + $0x58] sm:$0xff]
    %v80 = vld [vmem:[#allocation3 + $0x60] sm:$0xff]
    %v81 = vld [vmem:[#allocation3 + $0x68] sm:$0xff]
    %v82 = vld [vmem:[#allocation3 + $0x70] sm:$0xff]
    %v83 = vld [vmem:[#allocation3 + $0x78] sm:$0xff]
    %v84 = vld [vmem:[#allocation3 + $0x80] sm:$0xff]
    %v85 = vld [vmem:[#allocation3 + $0x88] sm:$0xff]
    %v86 = vld [vmem:[#allocation3 + $0x90] sm:$0xff]
    %v87 = vld [vmem:[#allocation3 + $0x98] sm:$0xff]
    %v88 = vld [vmem:[#allocation3 + $0xa0] sm:$0xff]
    %v89 = vld [vmem:[#allocation3 + $0xa8] sm:$0xff]
    %v90 = vld [vmem:[#allocation3 + $0xb0] sm:$0xff]
    %v91 = vld [vmem:[#allocation3 + $0xb8] sm:$0xff]
    %v92 = vld [vmem:[#allocation3 + $0xc0] sm:$0xff]
    %v93 = vld [vmem:[#allocation3 + $0xc8] sm:$0xff]
    %v94 = vld [vmem:[#allocation3 + $0xd0] sm:$0xff]
    %v95 = vld [vmem:[#allocation3 + $0xd8] sm:$0xff]
    %v96 = vld [vmem:[#allocation6] sm:$0xff]
    %v97 = vld [vmem:[#allocation6 + $0x8] sm:$0xff]
    %v98 = vld [vmem:[#allocation6 + $0x10] sm:$0xff]
    %v99 = vld [vmem:[#allocation6 + $0x18] sm:$0xff]
    %v100 = vld [vmem:[#allocation6 + $0x20] sm:$0xff]
    %v101 = vld [vmem:[#allocation6 + $0x28] sm:$0xff]
    %v102 = vld [vmem:[#allocation6 + $0x30] sm:$0xff]
    %v103 = vld [vmem:[#allocation6 + $0x38] sm:$0xff]
    %v104 = vld [vmem:[#allocation6 + $0x40] sm:$0xff]
    %v105 = vld [vmem:[#allocation6 + $0x48] sm:$0xff]
    %v106 = vld [vmem:[#allocation6 + $0x50] sm:$0xff]
    %v107 = vld [vmem:[#allocation6 + $0x58] sm:$0xff]
    %v108 = vld [vmem:[#allocation6 + $0x60] sm:$0xff]
    %v109 = vld [vmem:[#allocation6 + $0x68] sm:$0xff]
    %v110 = vld [vmem:[#allocation6 + $0x70] sm:$0xff]
    %v111 = vld [vmem:[#allocation6 + $0x78] sm:$0xff]
    %v112 = vld [vmem:[#allocation6 + $0x80] sm:$0xff]
    %v113 = vld [vmem:[#allocation6 + $0x88] sm:$0xff]
    %v114 = vld [vmem:[#allocation6 + $0x90] sm:$0xff]
    %v115 = vld [vmem:[#allocation6 + $0x98] sm:$0xff]
    %v116 = vld [vmem:[#allocation6 + $0xa0] sm:$0xff]
    %v117 = vld [vmem:[#allocation6 + $0xa8] sm:$0xff]
    %v118 = vld [vmem:[#allocation6 + $0xb0] sm:$0xff]
    %v119 = vld [vmem:[#allocation6 + $0xb8] sm:$0xff]
    %v120 = vld [vmem:[#allocation6 + $0xc0] sm:$0xff]
    %v121 = vld [vmem:[#allocation6 + $0xc8] sm:$0xff]
    %v122 = vld [vmem:[#allocation6 + $0xd0] sm:$0xff]
    %v123 = vld [vmem:[#allocation6 + $0xd8] sm:$0xff]
    %v124 = vld [vmem:[#allocation6 + $0xe0] sm:$0xff]
    %v125 = vld [vmem:[#allocation6 + $0xe8] sm:$0xff]
    %v126 = vld [vmem:[#allocation6 + $0xf0] sm:$0xff]
    %v127 = vld [vmem:[#allocation6 + $0xf8] sm:$0xff]
    %v128 = vld [vmem:[#allocation6 + $0x100] sm:$0xff]
    %v129 = vld [vmem:[#allocation6 + $0x108] sm:$0xff]
    %v130 = vld [vmem:[#allocation6 + $0x110] sm:$0xff]
    %v131 = vld [vmem:[#allocation6 + $0x118] sm:$0xff]
    %v132 = vld [vmem:[#allocation6 + $0x120] sm:$0xff]
    %v133 = vld [vmem:[#allocation6 + $0x128] sm:$0xff]
    %v134 = vld [vmem:[#allocation6 + $0x130] sm:$0xff]
    %v135 = vld [vmem:[#allocation6 + $0x138] sm:$0xff]
    %v136 = vld [vmem:[#allocation6 + $0x140] sm:$0xff]
    %v137 = vld [vmem:[#allocation6 + $0x148] sm:$0xff]
    %v138 = vld [vmem:[#allocation6 + $0x150] sm:$0xff]
    %v139 = vld [vmem:[#allocation6 + $0x158] sm:$0xff]
    %v140 = vld [vmem:[#allocation6 + $0x160] sm:$0xff]
    %v141 = vld [vmem:[#allocation6 + $0x168] sm:$0xff]
    %v142 = vld [vmem:[#allocation6 + $0x170] sm:$0xff]
    %v143 = vld [vmem:[#allocation6 + $0x178] sm:$0xff]
    %v144 = vld [vmem:[#allocation6 + $0x180] sm:$0xff]
    %v145 = vld [vmem:[#allocation6 + $0x188] sm:$0xff]
    %v146 = vld [vmem:[#allocation6 + $0x190] sm:$0xff]
    %v147 = vld [vmem:[#allocation6 + $0x198] sm:$0xff]
    %v148 = vld [vmem:[#allocation6 + $0x1a0] sm:$0xff]
    %v149 = vld [vmem:[#allocation6 + $0x1a8] sm:$0xff]
    %v150 = vld [vmem:[#allocation6 + $0x1b0] sm:$0xff]
    %v151 = vld [vmem:[#allocation6 + $0x1b8] sm:$0xff]
    %v152 = vld [vmem:[#allocation6 + $0x1c0] sm:$0xff]
    %v153 = vld [vmem:[#allocation6 + $0x1c8] sm:$0xff]
    %v154 = vld [vmem:[#allocation6 + $0x1d0] sm:$0xff]
    %v155 = vld [vmem:[#allocation6 + $0x1d8] sm:$0xff]
    %v156 = vld [vmem:[#allocation6 + $0x1e0] sm:$0xff]
    %v157 = vld [vmem:[#allocation6 + $0x1e8] sm:$0xff]
    %v158 = vld [vmem:[#allocation6 + $0x1f0] sm:$0xff]
    %v159 = vld [vmem:[#allocation6 + $0x1f8] sm:$0xff]
    %v160 = vld [vmem:[#allocation6 + $0x200] sm:$0xff]
    %v161 = vld [vmem:[#allocation6 + $0x208] sm:$0xff]
    %v162 = vld [vmem:[#allocation6 + $0x210] sm:$0xff]
    %v163 = vld [vmem:[#allocation6 + $0x218] sm:$0xff]
    %v164 = vld [vmem:[#allocation6 + $0x220] sm:$0xff]
    %v165 = vld [vmem:[#allocation6 + $0x228] sm:$0xff]
    %v166 = vld [vmem:[#allocation6 + $0x230] sm:$0xff]
    %v167 = vld [vmem:[#allocation6 + $0x238] sm:$0xff]
    %v168 = vld [vmem:[#allocation6 + $0x240] sm:$0xff]
    %v169 = vld [vmem:[#allocation6 + $0x248] sm:$0xff]
    %v170 = vld [vmem:[#allocation6 + $0x250] sm:$0xff]
    %v171 = vld [vmem:[#allocation6 + $0x258] sm:$0xff]
    %v172 = vld [vmem:[#allocation6 + $0x260] sm:$0xff]
    %v173 = vld [vmem:[#allocation6 + $0x268] sm:$0xff]
    %v174 = vld [vmem:[#allocation6 + $0x270] sm:$0xff]
    %v175 = vld [vmem:[#allocation6 + $0x278] sm:$0xff]
    %v176 = vld [vmem:[#allocation6 + $0x280] sm:$0xff]
    %v177 = vld [vmem:[#allocation6 + $0x288] sm:$0xff]
    %v178 = vld [vmem:[#allocation6 + $0x290] sm:$0xff]
    %v179 = vld [vmem:[#allocation6 + $0x298] sm:$0xff]
    %v180 = vld [vmem:[#allocation6 + $0x2a0] sm:$0xff]
    %v181 = vld [vmem:[#allocation6 + $0x2a8] sm:$0xff]
    %v182 = vld [vmem:[#allocation6 + $0x2b0] sm:$0xff]
    %v183 = vld [vmem:[#allocation6 + $0x2b8] sm:$0xff]
    %v184 = vld [vmem:[#allocation6 + $0x2c0] sm:$0xff]
    %v185 = vld [vmem:[#allocation6 + $0x2c8] sm:$0xff]
    %v186 = vld [vmem:[#allocation6 + $0x2d0] sm:$0xff]
    %v187 = vld [vmem:[#allocation6 + $0x2d8] sm:$0xff]
    %v188 = vld [vmem:[#allocation6 + $0x2e0] sm:$0xff]
    %v189 = vld [vmem:[#allocation6 + $0x2e8] sm:$0xff]
    %v190 = vld [vmem:[#allocation6 + $0x2f0] sm:$0xff]
    %v191 = vld [vmem:[#allocation6 + $0x2f8] sm:$0xff]
    %v192 = vld [vmem:[#allocation6 + $0x300] sm:$0xff]
    %v193 = vld [vmem:[#allocation6 + $0x308] sm:$0xff]
    %v194 = vld [vmem:[%s2] sm:$0x1]
    %v196 = vperm.slane %v194, 0
    %vm198 = vcmask 130048
    %v200 = vsel %vm198, %v74, 0
    %v203 = vsel %vm198, %v81, 0
    %v206 = vsel %vm198, %v88, 0
    %v209 = vsel %vm198, %v95, 0
    %211 = vmatpush.msra.mxu0 %v111
    %212 = vmatpush.msra.mxu0 %v110
    %213 = vmatpush.msra.mxu0 %v109
    %214 = vmatpush.msra.mxu0 %v108
    %215 = vmatpush.msra.mxu0 %v107
    %216 = vmatpush.msra.mxu0 %v106
    %217 = vmatpush.msra.mxu0 %v105
    %218 = vmatpush.msra.mxu0 %v104
    %219 = vmatpush.msra.mxu0 %v103
    %220 = vmatpush.msra.mxu0 %v102
    %221 = vmatpush.msra.mxu0 %v101
    %222 = vmatpush.msra.mxu0 %v100
    %223 = vmatpush.msra.mxu0 %v99
    %224 = vmatpush.msra.mxu0 %v98
    %225 = vmatpush.msra.mxu0 %v97
    %226 = vmatpush.msra.mxu0 %v96
    %227 = vmatmul.f32.gmra.mxu0 %v68
    %v228 = vpop.f32.mrf.mxu0
    %v229 = vadd.f32 %v196, %v228
    %230 = vmatmul.f32.gmra.mxu0 %v75
    %v231 = vpop.f32.mrf.mxu0
    %v232 = vadd.f32 %v196, %v231
    %233 = vmatmul.f32.gmra.mxu0 %v82
    %v234 = vpop.f32.mrf.mxu0
    %v235 = vadd.f32 %v196, %v234
    %236 = vmatmul.f32.gmra.mxu0 %v89
    %v237 = vpop.f32.mrf.mxu0
    %v238 = vadd.f32 %v196, %v237
    %239 = vdwg.mxu0
    %240 = vmatpush.msra.mxu0 %v127
    %241 = vmatpush.msra.mxu0 %v126
    %242 = vmatpush.msra.mxu0 %v125
    %243 = vmatpush.msra.mxu0 %v124
    %244 = vmatpush.msra.mxu0 %v123
    %245 = vmatpush.msra.mxu0 %v122
    %246 = vmatpush.msra.mxu0 %v121
    %247 = vmatpush.msra.mxu0 %v120
    %248 = vmatpush.msra.mxu0 %v119
    %249 = vmatpush.msra.mxu0 %v118
    %250 = vmatpush.msra.mxu0 %v117
    %251 = vmatpush.msra.mxu0 %v116
    %252 = vmatpush.msra.mxu0 %v115
    %253 = vmatpush.msra.mxu0 %v114
    %254 = vmatpush.msra.mxu0 %v113
    %255 = vmatpush.msra.mxu0 %v112
    %256 = vmatmul.f32.gmra.mxu0 %v69
    %v257 = vpop.f32.mrf.mxu0
    %v258 = vadd.f32 %v229, %v257
    %259 = vmatmul.f32.gmra.mxu0 %v76
    %v260 = vpop.f32.mrf.mxu0
    %v261 = vadd.f32 %v232, %v260
    %262 = vmatmul.f32.gmra.mxu0 %v83
    %v263 = vpop.f32.mrf.mxu0
    %v264 = vadd.f32 %v235, %v263
    %265 = vmatmul.f32.gmra.mxu0 %v90
    %v266 = vpop.f32.mrf.mxu0
    %v267 = vadd.f32 %v238, %v266
    %268 = vdwg.mxu0
    %269 = vmatpush.msra.mxu0 %v143
    %270 = vmatpush.msra.mxu0 %v142
    %271 = vmatpush.msra.mxu0 %v141
    %272 = vmatpush.msra.mxu0 %v140
    %273 = vmatpush.msra.mxu0 %v139
    %274 = vmatpush.msra.mxu0 %v138
    %275 = vmatpush.msra.mxu0 %v137
    %276 = vmatpush.msra.mxu0 %v136
    %277 = vmatpush.msra.mxu0 %v135
    %278 = vmatpush.msra.mxu0 %v134
    %279 = vmatpush.msra.mxu0 %v133
    %280 = vmatpush.msra.mxu0 %v132
    %281 = vmatpush.msra.mxu0 %v131
    %282 = vmatpush.msra.mxu0 %v130
    %283 = vmatpush.msra.mxu0 %v129
    %284 = vmatpush.msra.mxu0 %v128
    %285 = vmatmul.f32.gmra.mxu0 %v70
    %v286 = vpop.f32.mrf.mxu0
    %v287 = vadd.f32 %v258, %v286
    %288 = vmatmul.f32.gmra.mxu0 %v77
    %v289 = vpop.f32.mrf.mxu0
    %v290 = vadd.f32 %v261, %v289
    %291 = vmatmul.f32.gmra.mxu0 %v84
    %v292 = vpop.f32.mrf.mxu0
    %v293 = vadd.f32 %v264, %v292
    %294 = vmatmul.f32.gmra.mxu0 %v91
    %v295 = vpop.f32.mrf.mxu0
    %v296 = vadd.f32 %v267, %v295
    %297 = vdwg.mxu0
    %298 = vmatpush.msra.mxu0 %v159
    %299 = vmatpush.msra.mxu0 %v158
    %300 = vmatpush.msra.mxu0 %v157
    %301 = vmatpush.msra.mxu0 %v156
    %302 = vmatpush.msra.mxu0 %v155
    %303 = vmatpush.msra.mxu0 %v154
    %304 = vmatpush.msra.mxu0 %v153
    %305 = vmatpush.msra.mxu0 %v152
    %306 = vmatpush.msra.mxu0 %v151
    %307 = vmatpush.msra.mxu0 %v150
    %308 = vmatpush.msra.mxu0 %v149
    %309 = vmatpush.msra.mxu0 %v148
    %310 = vmatpush.msra.mxu0 %v147
    %311 = vmatpush.msra.mxu0 %v146
    %312 = vmatpush.msra.mxu0 %v145
    %313 = vmatpush.msra.mxu0 %v144
    %314 = vmatmul.f32.gmra.mxu0 %v71
    %v315 = vpop.f32.mrf.mxu0
    %v316 = vadd.f32 %v287, %v315
    %317 = vmatmul.f32.gmra.mxu0 %v78
    %v318 = vpop.f32.mrf.mxu0
    %v319 = vadd.f32 %v290, %v318
    %320 = vmatmul.f32.gmra.mxu0 %v85
    %v321 = vpop.f32.mrf.mxu0
    %v322 = vadd.f32 %v293, %v321
    %323 = vmatmul.f32.gmra.mxu0 %v92
    %v324 = vpop.f32.mrf.mxu0
    %v325 = vadd.f32 %v296, %v324
    %326 = vdwg.mxu0
    %327 = vmatpush.msra.mxu0 %v175
    %328 = vmatpush.msra.mxu0 %v174
    %329 = vmatpush.msra.mxu0 %v173
    %330 = vmatpush.msra.mxu0 %v172
    %331 = vmatpush.msra.mxu0 %v171
    %332 = vmatpush.msra.mxu0 %v170
    %333 = vmatpush.msra.mxu0 %v169
    %334 = vmatpush.msra.mxu0 %v168
    %335 = vmatpush.msra.mxu0 %v167
    %336 = vmatpush.msra.mxu0 %v166
    %337 = vmatpush.msra.mxu0 %v165
    %338 = vmatpush.msra.mxu0 %v164
    %339 = vmatpush.msra.mxu0 %v163
    %340 = vmatpush.msra.mxu0 %v162
    %341 = vmatpush.msra.mxu0 %v161
    %342 = vmatpush.msra.mxu0 %v160
    %343 = vmatmul.f32.gmra.mxu0 %v72
    %v344 = vpop.f32.mrf.mxu0
    %v345 = vadd.f32 %v316, %v344
    %346 = vmatmul.f32.gmra.mxu0 %v79
    %v347 = vpop.f32.mrf.mxu0
    %v348 = vadd.f32 %v319, %v347
    %349 = vmatmul.f32.gmra.mxu0 %v86
    %v350 = vpop.f32.mrf.mxu0
    %v351 = vadd.f32 %v322, %v350
    %352 = vmatmul.f32.gmra.mxu0 %v93
    %v353 = vpop.f32.mrf.mxu0
    %v354 = vadd.f32 %v325, %v353
    %355 = vdwg.mxu0
    %356 = vmatpush.msra.mxu0 %v191
    %357 = vmatpush.msra.mxu0 %v190
    %358 = vmatpush.msra.mxu0 %v189
    %359 = vmatpush.msra.mxu0 %v188
    %360 = vmatpush.msra.mxu0 %v187
    %361 = vmatpush.msra.mxu0 %v186
    %362 = vmatpush.msra.mxu0 %v185
    %363 = vmatpush.msra.mxu0 %v184
    %364 = vmatpush.msra.mxu0 %v183
    %365 = vmatpush.msra.mxu0 %v182
    %366 = vmatpush.msra.mxu0 %v181
    %367 = vmatpush.msra.mxu0 %v180
    %368 = vmatpush.msra.mxu0 %v179
    %369 = vmatpush.msra.mxu0 %v178
    %370 = vmatpush.msra.mxu0 %v177
    %371 = vmatpush.msra.mxu0 %v176
    %372 = vmatmul.f32.gmra.mxu0 %v73
    %v373 = vpop.f32.mrf.mxu0
    %v374 = vadd.f32 %v345, %v373
    %375 = vmatmul.f32.gmra.mxu0 %v80
    %v376 = vpop.f32.mrf.mxu0
    %v377 = vadd.f32 %v348, %v376
    %378 = vmatmul.f32.gmra.mxu0 %v87
    %v379 = vpop.f32.mrf.mxu0
    %v380 = vadd.f32 %v351, %v379
    %381 = vmatmul.f32.gmra.mxu0 %v94
    %v382 = vpop.f32.mrf.mxu0
    %v383 = vadd.f32 %v354, %v382
    %384 = vdwg.mxu0
    %385 = vmatpush.msra.mxu0 0.0
    %386 = vmatpush.msra.mxu0 0.0
    %387 = vmatpush.msra.mxu0 0.0
    %388 = vmatpush.msra.mxu0 0.0
    %389 = vmatpush.msra.mxu0 0.0
    %390 = vmatpush.msra.mxu0 0.0
    %391 = vmatpush.msra.mxu0 0.0
    %392 = vmatpush.msra.mxu0 0.0
    %393 = vmatpush.msra.mxu0 0.0
    %394 = vmatpush.msra.mxu0 0.0
    %395 = vmatpush.msra.mxu0 0.0
    %396 = vmatpush.msra.mxu0 0.0
    %397 = vmatpush.msra.mxu0 0.0
    %398 = vmatpush.msra.mxu0 0.0
    %399 = vmatpush.msra.mxu0 %v193
    %400 = vmatpush.msra.mxu0 %v192
    %401 = vmatmul.f32.gmra.mxu0 %v200
    %v402 = vpop.f32.mrf.mxu0
    %v403 = vadd.f32 %v374, %v402
    %404 = vmatmul.f32.gmra.mxu0 %v203
    %v405 = vpop.f32.mrf.mxu0
    %v406 = vadd.f32 %v377, %v405
    %407 = vmatmul.f32.gmra.mxu0 %v206
    %v408 = vpop.f32.mrf.mxu0
    %v409 = vadd.f32 %v380, %v408
    %410 = vmatmul.f32.gmra.mxu0 %v209
    %v411 = vpop.f32.mrf.mxu0
    %v412 = vadd.f32 %v383, %v411
    %413 = vdwg.mxu0
    %v414 = vmax.f32 %v403, 0.0
    %v415 = vmax.f32 %v406, 0.0
    %v416 = vmax.f32 %v409, 0.0
    %v417 = vmax.f32 %v412, 0.0
    %418 = vst [vmem:[#allocation2] sm:$0xff] %v414
    %419 = vst [vmem:[#allocation2 + $0x8] sm:$0xff] %v415
    %420 = vst [vmem:[#allocation2 + $0x10] sm:$0xff] %v416
    %421 = vst [vmem:[#allocation2 + $0x18] sm:$0xff] %v417
    %v422 = vld [vmem:[#allocation2] sm:$0xff]
    %v423 = vld [vmem:[#allocation2 + $0x8] sm:$0xff]
    %v424 = vld [vmem:[#allocation2 + $0x10] sm:$0xff]
    %v425 = vld [vmem:[#allocation2 + $0x18] sm:$0xff]
    %v426 = vld [vmem:[#allocation8] sm:$0xff]
    %v427 = vld [vmem:[#allocation8 + $0x8] sm:$0xff]
    %v428 = vld [vmem:[#allocation8 + $0x10] sm:$0xff]
    %v429 = vld [vmem:[#allocation8 + $0x18] sm:$0xff]
    %v430 = vld [vmem:[#allocation8 + $0x20] sm:$0xff]
    %v431 = vld [vmem:[#allocation8 + $0x28] sm:$0xff]
    %v432 = vld [vmem:[#allocation8 + $0x30] sm:$0xff]
    %v433 = vld [vmem:[#allocation8 + $0x38] sm:$0xff]
    %v434 = vld [vmem:[#allocation8 + $0x40] sm:$0xff]
    %v435 = vld [vmem:[#allocation8 + $0x48] sm:$0xff]
    %v436 = vld [vmem:[#allocation8 + $0x50] sm:$0xff]
    %v437 = vld [vmem:[#allocation8 + $0x58] sm:$0xff]
    %v438 = vld [vmem:[#allocation8 + $0x60] sm:$0xff]
    %v439 = vld [vmem:[#allocation8 + $0x68] sm:$0xff]
    %v440 = vld [vmem:[#allocation8 + $0x70] sm:$0xff]
    %v441 = vld [vmem:[#allocation8 + $0x78] sm:$0xff]
    %v442 = vld [vmem:[%s4] sm:$0x1]
    %v444 = vperm.slane %v442, 0
    %446 = vmatpush.msra.mxu0 %v441
    %447 = vmatpush.msra.mxu0 %v440
    %448 = vmatpush.msra.mxu0 %v439
    %449 = vmatpush.msra.mxu0 %v438
    %450 = vmatpush.msra.mxu0 %v437
    %451 = vmatpush.msra.mxu0 %v436
    %452 = vmatpush.msra.mxu0 %v435
    %453 = vmatpush.msra.mxu0 %v434
    %454 = vmatpush.msra.mxu0 %v433
    %455 = vmatpush.msra.mxu0 %v432
    %456 = vmatpush.msra.mxu0 %v431
    %457 = vmatpush.msra.mxu0 %v430
    %458 = vmatpush.msra.mxu0 %v429
    %459 = vmatpush.msra.mxu0 %v428
    %460 = vmatpush.msra.mxu0 %v427
    %461 = vmatpush.msra.mxu0 %v426
    %462 = vmatmul.f32.gmra.mxu0 %v422
    %v463 = vpop.f32.mrf.mxu0
    %v464 = vadd.f32 %v444, %v463
    %465 = vmatmul.f32.gmra.mxu0 %v423
    %v466 = vpop.f32.mrf.mxu0
    %v467 = vadd.f32 %v444, %v466
    %468 = vmatmul.f32.gmra.mxu0 %v424
    %v469 = vpop.f32.mrf.mxu0
    %v470 = vadd.f32 %v444, %v469
    %471 = vmatmul.f32.gmra.mxu0 %v425
    %v472 = vpop.f32.mrf.mxu0
    %v473 = vadd.f32 %v444, %v472
    %474 = vdwg.mxu0
    %475 = vst [vmem:[#allocation9] sm:$0xff] %v464
    %476 = vst [vmem:[#allocation9 + $0x8] sm:$0xff] %v467
    %477 = vst [vmem:[#allocation9 + $0x10] sm:$0xff] %v470
    %478 = vst [vmem:[#allocation9 + $0x18] sm:$0xff] %v473
    // Predicated region
    $region34: #{tpu_custom_call.1} parent=1 // pred_check
      _
    $region35: #{tpu_custom_call.1} parent=1 // pred_check_branch
      %480 = sbr.rel (0) target = $region37
    $region36: #{tpu_custom_call.1} parent=1 // pred_region
      %482 = vsyncadd [#allocation5], 0
      %s483 = sshll.u32 [#allocation9], 4
      %s484 = int_to_ptr.vmem [resolvable:$true] %s483
      %s485 = sshll.u32 %s5, 4
      %s486 = int_to_ptr.hbm [resolvable:$true] %s485
      %491 = dma.vmem_to_hbm [thread:$0]  %s484, 512, %s486, [#allocation5], 128, 128, 8
    $region37: #{tpu_custom_call.1} parent=1 // pred_fallthru
      _
    // Predicated region
    $region38: #{tpu_custom_call.1} parent=1 // pred_check
      _
    $region39: #{tpu_custom_call.1} parent=1 // pred_check_branch
      %493 = sbr.rel (0) target = $region41
    $region40: #{tpu_custom_call.1} parent=1 // pred_region
      %495 = dma.done [#allocation5], 512
    $region41: #{tpu_custom_call.1} parent=1 // pred_fallthru
      _
    %496 = vsyncpa [#allocation4], 1
    %497 = vsyncpa [#allocation7], 1
    %498 = vsyncpa [#allocation5], 1

</llo_original>
